<compile_context>
chip_gen: v7x
topology: tpu7x:2x2x1
jax: 0.10.0
libtpu: 0.0.40
codegen_flags: <defaults>
</compile_context>

<pallas_src>
import math

import jax
import jax.numpy as jnp
from jax.experimental import pallas as pl
from jax.experimental.pallas import tpu as pltpu

LANE = 128
SUBLANE = 8


def _round_up(x, m):
    return ((x + m - 1) // m) * m


# ----------------------------------------------------------------------------
# Kernel
# ----------------------------------------------------------------------------
def actor_kernel(x_ref, w1_ref, w2_ref, w3_ref, b_ref, o_ref):
    """Fused 3-layer MLP on one (TB, in_dim) batch tile.

    Weights are full-shape and grid-resident (constant index_map).  Biases are
    rows of b_ref: row 0 -> b1, row 1 -> b2, row 2 -> b3, each zero-padded to
    NP lanes.  Padded weight columns / bias lanes are zero, so padded
    activation lanes stay exactly zero through ReLU and tanh.
    """
    x = x_ref[...]
    b1 = b_ref[0:1, :]  # (1, NP) -> broadcasts over the batch tile
    b2 = b_ref[1:2, :]
    b3 = b_ref[2:3, :]

    # fc1 + ReLU (f32 accumulation regardless of compute dtype)
    h = jnp.dot(x, w1_ref[...], preferred_element_type=jnp.float32) + b1
    h = jnp.maximum(h, 0.0)

    # fc2 + ReLU (cast back to compute dtype only if weights are narrow)
    h = jnp.dot(h.astype(w2_ref.dtype), w2_ref[...],
                preferred_element_type=jnp.float32) + b2
    h = jnp.maximum(h, 0.0)

    # fc3 + tanh (tanh runs on the EUP in f32; store is full-lane, unmasked)
    h = jnp.dot(h.astype(w3_ref.dtype), w3_ref[...],
                preferred_element_type=jnp.float32) + b3
    o_ref[...] = jnp.tanh(h).astype(o_ref.dtype)


# ----------------------------------------------------------------------------
# Wrapper
# ----------------------------------------------------------------------------
def actor_forward(states, packed_params, out_dim, *,
                  block_batch=512, compute_dtype=jnp.float32):
    """states: [B, input_size] f32 -> actions: [B, out_dim] f32.

    block_batch: batch tile size (rounded to a multiple of 8).  Per-tile VMEM
    is ~ (in_dim + 2*NP)*4 bytes/row double-buffered, i.e. a few KB/row, so
    256-1024 fits comfortably under the 32 MiB scoped VMEM limit on every chip
    (v7x physical VMEM is 64 MiB).
    compute_dtype: jnp.float32 (exact) or jnp.bfloat16 (higher MXU rate and
    half the weight/x DMA bytes; accumulation stays f32 either way).
    """
    w1p, w2p, w3p, bp = packed_params
    B, in_dim = states.shape
    NP = w1p.shape[1]  # unified padded feature width (multiple of 128)

    # Batch tile: multiple of 8 sublanes, capped at block_batch.
    tb = _round_up(min(block_batch, max(B, SUBLANE)), SUBLANE)
    b_padded = _round_up(B, tb)

    x = states.astype(compute_dtype)
    if b_padded != B:
        x = jnp.pad(x, ((0, b_padded - B), (0, 0)))

    grid = (b_padded // tb,)

    out = pl.pallas_call(
        actor_kernel,
        out_shape=jax.ShapeDtypeStruct((b_padded, NP), jnp.float32),
        grid_spec=pltpu.PrefetchScalarGridSpec(
            num_scalar_prefetch=0,
            grid=grid,
            in_specs=[
                # x: tiled over the batch grid axis
                pl.BlockSpec((tb, in_dim), lambda i: (i, 0)),
                # weights / packed biases: full blocks, resident across grid
                pl.BlockSpec((in_dim, NP), lambda i: (0, 0)),
                pl.BlockSpec((NP, NP), lambda i: (0, 0)),
                pl.BlockSpec((NP, NP), lambda i: (0, 0)),
                pl.BlockSpec((3, NP), lambda i: (0, 0)),
            ],
            out_specs=pl.BlockSpec((tb, NP), lambda i: (i, 0)),
        ),
        compiler_params=pltpu.CompilerParams(
            dimension_semantics=("parallel",),        # v7x: both TCs share the batch
            vmem_limit_bytes=32 * 1024 * 1024,        # explicit, with large headroom
        ),
    )(x, w1p, w2p, w3p, bp)

    # Drop batch padding and padded output lanes outside the kernel.
    return out[:B, :out_dim]


# ----------------------------------------------------------------------------
# Parameter init (matches the PyTorch module) + lane-dense packing
# ----------------------------------------------------------------------------
def xavier_uniform(key, fan_in, fan_out):
    # Matches nn.init.xavier_uniform_ (gain=1); stored as [in, out].
    limit = math.sqrt(6.0 / (fan_in + fan_out))
    return jax.random.uniform(
        key, (fan_in, fan_out), dtype=jnp.float32, minval=-limit, maxval=limit
    )


def linear_bias(key, fan_in, fan_out):
    # PyTorch nn.Linear default bias init: U(-1/sqrt(fan_in), 1/sqrt(fan_in)).
    bound = 1.0 / math.sqrt(fan_in)
    return jax.random.uniform(
        key, (fan_out,), dtype=jnp.float32, minval=-bound, maxval=bound
    )


def init_actor_params(key, layer_sizes):
    # layer_sizes = {'l1': (in, h1), 'l2': (h1, h2), 'l3': (h2, act)}
    keys = jax.random.split(key, 6)
    i1, o1 = layer_sizes['l1']
    i2, o2 = layer_sizes['l2']
    i3, o3 = layer_sizes['l3']
    return (
        xavier_uniform(keys[0], i1, o1), linear_bias(keys[1], i1, o1),
        xavier_uniform(keys[2], i2, o2), linear_bias(keys[3], i2, o2),
        xavier_uniform(keys[4], i3, o3), linear_bias(keys[5], i3, o3),
    )


def pack_actor_params(params, compute_dtype=jnp.float32):
    """Zero-pad all feature widths to one lane-multiple NP and pack the three
    biases into a single (3, NP) f32 array.  Padding is pure layout plumbing:
    padded weight columns / bias lanes are zero, so padded lanes carry exact
    zeros through ReLU/tanh and are sliced off in the wrapper."""
    w1, b1, w2, b2, w3, b3 = params
    in_dim = w1.shape[0]
    h1, h2, out_dim = w1.shape[1], w2.shape[1], w3.shape[1]
    np_width = _round_up(max(h1, h2, out_dim), LANE)

    w1p = jnp.zeros((in_dim, np_width), jnp.float32).at[:, :h1].set(w1)
    w2p = jnp.zeros((np_width, np_width), jnp.float32).at[:h1, :h2].set(w2)
    w3p = jnp.zeros((np_width, np_width), jnp.float32).at[:h2, :out_dim].set(w3)

    bp = jnp.zeros((3, np_width), jnp.float32)
    bp = bp.at[0, :h1].set(b1)
    bp = bp.at[1, :h2].set(b2)
    bp = bp.at[2, :out_dim].set(b3)

    packed = (w1p.astype(compute_dtype), w2p.astype(compute_dtype),
              w3p.astype(compute_dtype), bp)
    return packed, out_dim


def actor_reference(states, params):
    """Pure-JAX reference (unpadded) for correctness checking."""
    w1, b1, w2, b2, w3, b3 = params
    h = jnp.maximum(states @ w1 + b1, 0.0)
    h = jnp.maximum(h @ w2 + b2, 0.0)
    return jnp.tanh(h @ w3 + b3)


if __name__ == "__main__":
    # Shapes consistent with the module: params['l1']=(32,64),
    # params['l2']=(64,64), params['l3']=(64,8).
    layer_sizes = {'l1': (32, 64), 'l2': (64, 64), 'l3': (64, 8)}
    batch = 8

    key = jax.random.PRNGKey(0)
    pkey, xkey = jax.random.split(key)
    params = init_actor_params(pkey, layer_sizes)
    packed, out_dim = pack_actor_params(params, compute_dtype=jnp.float32)
    states = jax.random.normal(
        xkey, (batch, layer_sizes['l1'][0]), dtype=jnp.float32)

    out = actor_forward(states, packed, out_dim)
    out = jax.block_until_ready(out)

    ref = actor_reference(states, params)
    assert out.shape == (batch, layer_sizes['l3'][1])
    assert jnp.allclose(out, ref, atol=1e-5, rtol=1e-5)

    print("KERNEL_OK")
</pallas_src>

<mosaic_0001>
module attributes {stable_mosaic.version = 11 : i64} {
  func.func @actor_kernel(%arg0: i32, %arg1: memref<8x32xf32, #tpu.memory_space<vmem>>, %arg2: memref<32x128xf32, #tpu.memory_space<vmem>>, %arg3: memref<128x128xf32, #tpu.memory_space<vmem>>, %arg4: memref<128x128xf32, #tpu.memory_space<vmem>>, %arg5: memref<3x128xf32, #tpu.memory_space<vmem>>, %arg6: memref<8x128xf32, #tpu.memory_space<vmem>>) attributes {dimension_semantics = [#tpu.dimension_semantics<parallel>], iteration_bounds = array<i64: 1>, scalar_prefetch = 0 : i64, scratch_operands = 0 : i64, tpu.core_type = #tpu.core_type<tc>, window_params = [{transform_indices = @transform_0, window_bounds = array<i64: 8, 32>}, {pipeline_mode = #tpu.pipeline_mode<synchronous>, transform_indices = @transform_1, window_bounds = array<i64: 32, 128>}, {pipeline_mode = #tpu.pipeline_mode<synchronous>, transform_indices = @transform_2, window_bounds = array<i64: 128, 128>}, {pipeline_mode = #tpu.pipeline_mode<synchronous>, transform_indices = @transform_3, window_bounds = array<i64: 128, 128>}, {pipeline_mode = #tpu.pipeline_mode<synchronous>, transform_indices = @transform_4, window_bounds = array<i64: 3, 128>}, {transform_indices = @transform_5, window_bounds = array<i64: 8, 128>}]} {
    %c0 = arith.constant 0 : index
    %c0_0 = arith.constant 0 : index
    %0 = vector.load %arg1[%c0, %c0_0] : memref<8x32xf32, #tpu.memory_space<vmem>>, vector<8x32xf32>
    %c0_1 = arith.constant 0 : index
    %c0_2 = arith.constant 0 : index
    %1 = vector.load %arg5[%c0_1, %c0_2] : memref<3x128xf32, #tpu.memory_space<vmem>>, vector<1x128xf32>
    %c1 = arith.constant 1 : index
    %c0_3 = arith.constant 0 : index
    %2 = vector.load %arg5[%c1, %c0_3] : memref<3x128xf32, #tpu.memory_space<vmem>>, vector<1x128xf32>
    %c2 = arith.constant 2 : index
    %c0_4 = arith.constant 0 : index
    %3 = vector.load %arg5[%c2, %c0_4] : memref<3x128xf32, #tpu.memory_space<vmem>>, vector<1x128xf32>
    %c0_5 = arith.constant 0 : index
    %c0_6 = arith.constant 0 : index
    %4 = vector.load %arg2[%c0_5, %c0_6] : memref<32x128xf32, #tpu.memory_space<vmem>>, vector<32x128xf32>
    %cst = arith.constant dense<0.000000e+00> : vector<8x128xf32>
    %5 = tpu.matmul %0, %4, %cst {dimension_numbers = #tpu.dot_dimension_numbers<[1], [0], [0], [1], [0, 0, 1, 1], [], []>} : vector<8x32xf32>, vector<32x128xf32>, vector<8x128xf32> -> vector<8x128xf32>
    %6 = vector.broadcast %1 : vector<1x128xf32> to vector<8x128xf32>
    %7 = arith.addf %5, %6 : vector<8x128xf32>
    %cst_7 = arith.constant 0.000000e+00 : f32
    %8 = vector.broadcast %cst_7 : f32 to vector<8x128xf32>
    %9 = arith.maximumf %7, %8 : vector<8x128xf32>
    %c0_8 = arith.constant 0 : index
    %c0_9 = arith.constant 0 : index
    %10 = vector.load %arg3[%c0_8, %c0_9] : memref<128x128xf32, #tpu.memory_space<vmem>>, vector<128x128xf32>
    %cst_10 = arith.constant dense<0.000000e+00> : vector<8x128xf32>
    %11 = tpu.matmul %9, %10, %cst_10 {dimension_numbers = #tpu.dot_dimension_numbers<[1], [0], [0], [1], [0, 0, 1, 1], [], []>} : vector<8x128xf32>, vector<128x128xf32>, vector<8x128xf32> -> vector<8x128xf32>
    %12 = vector.broadcast %2 : vector<1x128xf32> to vector<8x128xf32>
    %13 = arith.addf %11, %12 : vector<8x128xf32>
    %cst_11 = arith.constant 0.000000e+00 : f32
    %14 = vector.broadcast %cst_11 : f32 to vector<8x128xf32>
    %15 = arith.maximumf %13, %14 : vector<8x128xf32>
    %c0_12 = arith.constant 0 : index
    %c0_13 = arith.constant 0 : index
    %16 = vector.load %arg4[%c0_12, %c0_13] : memref<128x128xf32, #tpu.memory_space<vmem>>, vector<128x128xf32>
    %cst_14 = arith.constant dense<0.000000e+00> : vector<8x128xf32>
    %17 = tpu.matmul %15, %16, %cst_14 {dimension_numbers = #tpu.dot_dimension_numbers<[1], [0], [0], [1], [0, 0, 1, 1], [], []>} : vector<8x128xf32>, vector<128x128xf32>, vector<8x128xf32> -> vector<8x128xf32>
    %18 = vector.broadcast %3 : vector<1x128xf32> to vector<8x128xf32>
    %19 = arith.addf %17, %18 : vector<8x128xf32>
    %20 = math.tanh %19 : vector<8x128xf32>
    %c0_15 = arith.constant 0 : index
    %c0_16 = arith.constant 0 : index
    %21 = vector.load %arg6[%c0_15, %c0_16] : memref<8x128xf32, #tpu.memory_space<vmem>>, vector<8x128xf32>
    tpu.vector_store %arg6[%c0_15, %c0_16], %20 {strides = array<i32>} : memref<8x128xf32, #tpu.memory_space<vmem>>, vector<8x128xf32>,
    return
  }
  func.func @transform_0(%arg0: i32) -> (i32, i32) {
    %c0_i32 = arith.constant 0 : i32
    %c0_i32_0 = arith.constant 0 : i32
    return %arg0, %c0_i32 : i32, i32
  }
  func.func @transform_1(%arg0: i32) -> (i32, i32) {
    %c0_i32 = arith.constant 0 : i32
    %c0_i32_0 = arith.constant 0 : i32
    %c0_i32_1 = arith.constant 0 : i32
    return %c0_i32, %c0_i32_0 : i32, i32
  }
  func.func @transform_2(%arg0: i32) -> (i32, i32) {
    %c0_i32 = arith.constant 0 : i32
    %c0_i32_0 = arith.constant 0 : i32
    %c0_i32_1 = arith.constant 0 : i32
    return %c0_i32, %c0_i32_0 : i32, i32
  }
  func.func @transform_3(%arg0: i32) -> (i32, i32) {
    %c0_i32 = arith.constant 0 : i32
    %c0_i32_0 = arith.constant 0 : i32
    %c0_i32_1 = arith.constant 0 : i32
    return %c0_i32, %c0_i32_0 : i32, i32
  }
  func.func @transform_4(%arg0: i32) -> (i32, i32) {
    %c0_i32 = arith.constant 0 : i32
    %c0_i32_0 = arith.constant 0 : i32
    %c0_i32_1 = arith.constant 0 : i32
    return %c0_i32, %c0_i32_0 : i32, i32
  }
  func.func @transform_5(%arg0: i32) -> (i32, i32) {
    %c0_i32 = arith.constant 0 : i32
    %c0_i32_0 = arith.constant 0 : i32
    return %arg0, %c0_i32 : i32, i32
  }
}

</mosaic_0001>

<llo_original>
// kernel: tpu_custom_call.1
$region0: #{tpu_custom_call.1}
  #allocation0 [shape = 'u32[]', space=smem, size = 0x4, offset = 0x4, fixed_abs, tag = 'smem constant byte address 0x4 - core index']
  #allocation1 [shape = 'u32[144,128]{1,0:T(1,128)}', space=vmem, size = 0x12000, scoped, tag = 'internal scratch']
  %s0 = inlined_call_operand.hbm [shape: f32[8,32], index: 0, kind: input, shape index: {}]
  %s1 = inlined_call_operand.hbm [shape: f32[32,128], index: 1, kind: input, shape index: {}]
  %s2 = inlined_call_operand.hbm [shape: f32[128,128], index: 2, kind: input, shape index: {}]
  %s3 = inlined_call_operand.hbm [shape: f32[128,128], index: 3, kind: input, shape index: {}]
  %s4 = inlined_call_operand.vmem [shape: f32[3,128], index: 4, kind: input, shape index: {}]
  %s5 = inlined_call_operand.hbm [shape: f32[8,128], index: 5, kind: output, shape index: {}]
  %s6 = sld [smem:[#allocation0]]
  $region46: #{tpu_custom_call.1} parent=0
    _
  %s8 = ssub.s32 1, %s6
  %s9 = scalar_select 0, %s8, %s6
  $region1: #{tpu_custom_call.1} parent=0
    #allocation2 [shape = 'u8[4096]{0}', space=vmem, size = 0x1000, scoped, tag = 'input window, operand 0, single buffered']
    #allocation3 [shape = 's32[1]{0}', space=sflag, size = 0x4, scoped, tag = 'scoped memory for tpu_custom_call.1']
    #allocation4 [shape = 's32[1]{0}', space=sflag, size = 0x4, scoped, tag = 'scoped memory for tpu_custom_call.1']
    #allocation5 [shape = 'u8[16384]{0}', space=vmem, size = 0x4000, scoped, tag = 'input window, operand 1, single buffered']
    #allocation6 [shape = 's32[1]{0}', space=sflag, size = 0x4, scoped, tag = 'scoped memory for tpu_custom_call.1']
    #allocation7 [shape = 'u8[65536]{0}', space=vmem, size = 0x10000, scoped, tag = 'input window, operand 2, single buffered']
    #allocation8 [shape = 'u8[65536]{0}', space=vmem, size = 0x10000, scoped, tag = 'input window, operand 3, single buffered']
    #allocation9 [shape = 's32[1]{0}', space=sflag, size = 0x4, scoped, tag = 'scoped memory for tpu_custom_call.1']
    #allocation10 [shape = 'u8[4096]{0}', space=vmem, size = 0x1000, scoped, tag = 'output window, operand 0, single buffered']
    %10 = vsyncpa [#allocation3], 0
    %11 = vsyncpa [#allocation6], 0
    %12 = vsyncpa [#allocation9], 0
    %13 = vsyncpa [#allocation4], 0
    // Predicated region
    $region2: #{tpu_custom_call.1} parent=1 // pred_check
      _
    $region3: #{tpu_custom_call.1} parent=1 // pred_check_branch
      %15 = sbr.rel (0) target = $region5
    $region4: #{tpu_custom_call.1} parent=1 // pred_region
      %s17 = ssub.s32 128, 128
      %18 = vsyncadd [#allocation3], %s17
      %s20 = sshll.u32 [#allocation2], 4
      %s21 = int_to_ptr.vmem [resolvable:$true] %s20
      %23 = dma.hbm_to_vmem [thread:$0]  %s0, 128, %s21, [#allocation3]
    $region5: #{tpu_custom_call.1} parent=1 // pred_fallthru
      _
    // Predicated region
    $region6: #{tpu_custom_call.1} parent=1 // pred_check
      _
    $region7: #{tpu_custom_call.1} parent=1 // pred_check_branch
      %25 = sbr.rel (0) target = $region9
    $region8: #{tpu_custom_call.1} parent=1 // pred_region
      %s27 = ssub.s32 512, 512
      %28 = vsyncadd [#allocation6], %s27
      %s29 = sshll.u32 [#allocation5], 4
      %s30 = int_to_ptr.vmem [resolvable:$true] %s29
      %35 = dma.hbm_to_vmem [thread:$0]  %s1, 512, %s30, [#allocation6], 128, 128, 8
    $region9: #{tpu_custom_call.1} parent=1 // pred_fallthru
      _
    // Predicated region
    $region10: #{tpu_custom_call.1} parent=1 // pred_check
      _
    $region11: #{tpu_custom_call.1} parent=1 // pred_check_branch
      %37 = sbr.rel (0) target = $region13
    $region12: #{tpu_custom_call.1} parent=1 // pred_region
      %s39 = ssub.s32 2048, 2048
      %40 = vsyncadd [#allocation6], %s39
      %s41 = sshll.u32 [#allocation7], 4
      %s42 = int_to_ptr.vmem [resolvable:$true] %s41
      %47 = dma.hbm_to_vmem [thread:$0]  %s2, 2048, %s42, [#allocation6], 128, 128, 8
    $region13: #{tpu_custom_call.1} parent=1 // pred_fallthru
      _
    // Predicated region
    $region14: #{tpu_custom_call.1} parent=1 // pred_check
      _
    $region15: #{tpu_custom_call.1} parent=1 // pred_check_branch
      %49 = sbr.rel (0) target = $region17
    $region16: #{tpu_custom_call.1} parent=1 // pred_region
      %s51 = ssub.s32 2048, 2048
      %52 = vsyncadd [#allocation9], %s51
      %s53 = sshll.u32 [#allocation8], 4
      %s54 = int_to_ptr.vmem [resolvable:$true] %s53
      %59 = dma.hbm_to_vmem [thread:$0]  %s3, 2048, %s54, [#allocation9], 128, 128, 8
    $region17: #{tpu_custom_call.1} parent=1 // pred_fallthru
      _
    // Predicated region
    $region18: #{tpu_custom_call.1} parent=1 // pred_check
      _
    $region19: #{tpu_custom_call.1} parent=1 // pred_check_branch
      %61 = sbr.rel (0) target = $region21
    $region20: #{tpu_custom_call.1} parent=1 // pred_region
      _
    $region21: #{tpu_custom_call.1} parent=1 // pred_fallthru
      _
    // Predicated region
    $region22: #{tpu_custom_call.1} parent=1 // pred_check
      _
    $region23: #{tpu_custom_call.1} parent=1 // pred_check_branch
      %63 = sbr.rel (0) target = $region25
    $region24: #{tpu_custom_call.1} parent=1 // pred_region
      %64 = dma.done [#allocation3], 128
    $region25: #{tpu_custom_call.1} parent=1 // pred_fallthru
      _
    // Predicated region
    $region26: #{tpu_custom_call.1} parent=1 // pred_check
      _
    $region27: #{tpu_custom_call.1} parent=1 // pred_check_branch
      %66 = sbr.rel (0) target = $region29
    $region28: #{tpu_custom_call.1} parent=1 // pred_region
      %67 = dma.done [#allocation6], 512
    $region29: #{tpu_custom_call.1} parent=1 // pred_fallthru
      _
    // Predicated region
    $region30: #{tpu_custom_call.1} parent=1 // pred_check
      _
    $region31: #{tpu_custom_call.1} parent=1 // pred_check_branch
      %69 = sbr.rel (0) target = $region33
    $region32: #{tpu_custom_call.1} parent=1 // pred_region
      %70 = dma.done [#allocation6], 2048
    $region33: #{tpu_custom_call.1} parent=1 // pred_fallthru
      _
    // Predicated region
    $region34: #{tpu_custom_call.1} parent=1 // pred_check
      _
    $region35: #{tpu_custom_call.1} parent=1 // pred_check_branch
      %72 = sbr.rel (0) target = $region37
    $region36: #{tpu_custom_call.1} parent=1 // pred_region
      %73 = dma.done [#allocation9], 2048
    $region37: #{tpu_custom_call.1} parent=1 // pred_fallthru
      _
    %v74 = vld [vmem:[#allocation2] sm:$0xff]
    %v75 = vld [vmem:[%s4] sm:$0x1]
    %v76 = vld [vmem:[%s4 + $0x1] sm:$0x1]
    %v77 = vld [vmem:[%s4 + $0x2] sm:$0x1]
    %v78 = vld [vmem:[#allocation5] sm:$0xff]
    %v79 = vld [vmem:[#allocation5 + $0x8] sm:$0xff]
    %v80 = vld [vmem:[#allocation5 + $0x10] sm:$0xff]
    %v81 = vld [vmem:[#allocation5 + $0x18] sm:$0xff]
    %v82 = vlaneseq
    %v83 = vshrl.u32 %v82, 7
    %v84 = vsub.s32 0, %v83
    %v85 = vrot.slane %v75, %v84
    %vm86 = vcmask 261120
    %v88 = vsel %vm86, %v74, 0
    %90 = vmatprep.subr.mxu0 0.0
    %91 = vmatpush1.msra.mxu0 %v78
    %92 = vmatprep.subr.mxu0 0.0
    %93 = vmatpush1.msra.mxu0 %v79
    %94 = vmatprep.subr.mxu0 0.0
    %95 = vmatpush1.msra.mxu0 %v80
    %96 = vmatprep.subr.mxu0 0.0
    %97 = vmatpush1.msra.mxu0 %v81
    %98 = vmatprep.subr.mxu0 0.0
    %99 = vmatpush1.msra.mxu0 0.0
    %100 = vmatprep.subr.mxu0 0.0
    %101 = vmatpush1.msra.mxu0 0.0
    %102 = vmatprep.subr.mxu0 0.0
    %103 = vmatpush1.msra.mxu0 0.0
    %104 = vmatprep.subr.mxu0 0.0
    %105 = vmatpush1.msra.mxu0 0.0
    %106 = vmatprep.subr.mxu0 0.0
    %107 = vmatpush1.msra.mxu0 0.0
    %108 = vmatprep.subr.mxu0 0.0
    %109 = vmatpush1.msra.mxu0 0.0
    %110 = vmatprep.subr.mxu0 0.0
    %111 = vmatpush1.msra.mxu0 0.0
    %112 = vmatprep.subr.mxu0 0.0
    %113 = vmatpush1.msra.mxu0 0.0
    %114 = vmatprep.subr.mxu0 0.0
    %115 = vmatpush1.msra.mxu0 0.0
    %116 = vmatprep.subr.mxu0 0.0
    %117 = vmatpush1.msra.mxu0 0.0
    %118 = vmatprep.subr.mxu0 0.0
    %119 = vmatpush1.msra.mxu0 0.0
    %120 = vmatprep.subr.mxu0 0.0
    %121 = vmatpush1.msra.mxu0 0.0
    %122 = vmatprep.subr.mxu0 0.0
    %123 = vmatpush1.msra.mxu0 0.0
    %124 = vmatprep.subr.mxu0 0.0
    %125 = vmatpush1.msra.mxu0 0.0
    %126 = vmatprep.subr.mxu0 0.0
    %127 = vmatpush1.msra.mxu0 0.0
    %128 = vmatprep.subr.mxu0 0.0
    %129 = vmatpush1.msra.mxu0 0.0
    %130 = vmatprep.subr.mxu0 0.0
    %131 = vmatpush1.msra.mxu0 0.0
    %132 = vmatprep.subr.mxu0 0.0
    %133 = vmatpush1.msra.mxu0 0.0
    %134 = vmatprep.subr.mxu0 0.0
    %135 = vmatpush1.msra.mxu0 0.0
    %136 = vmatprep.subr.mxu0 0.0
    %137 = vmatpush1.msra.mxu0 0.0
    %138 = vmatprep.subr.mxu0 0.0
    %139 = vmatpush1.msra.mxu0 0.0
    %140 = vmatprep.subr.mxu0 0.0
    %141 = vmatpush1.msra.mxu0 0.0
    %142 = vmatprep.subr.mxu0 0.0
    %143 = vmatpush1.msra.mxu0 0.0
    %144 = vmatprep.subr.mxu0 0.0
    %145 = vmatpush1.msra.mxu0 0.0
    %146 = vmatprep.subr.mxu0 0.0
    %147 = vmatpush1.msra.mxu0 0.0
    %148 = vmatprep.subr.mxu0 0.0
    %149 = vmatpush1.msra.mxu0 0.0
    %150 = vmatprep.subr.mxu0 0.0
    %151 = vmatpush1.msra.mxu0 0.0
    %152 = vmatprep.subr.mxu0 0.0
    %153 = vmatpush1.msra.mxu0 0.0
    %154 = vmatprep.mubr.f32.mxu0 0.0
    %155 = vmatmul.mubr.f32.gmra.mrb[0].mxu0 %v88
    %v156 = vpop.f32.mrb[0].mxu0
    %v157 = vadd.f32 %v85, %v156
    %v158 = vpop.f32.mrb[0].mxu0
    %159 = vdwg.mxu0
    %v160 = vmax.f32 %v157, 0.0
    %v161 = vld [vmem:[#allocation7] sm:$0xff]
    %v162 = vld [vmem:[#allocation7 + $0x8] sm:$0xff]
    %v163 = vld [vmem:[#allocation7 + $0x10] sm:$0xff]
    %v164 = vld [vmem:[#allocation7 + $0x18] sm:$0xff]
    %v165 = vld [vmem:[#allocation7 + $0x20] sm:$0xff]
    %v166 = vld [vmem:[#allocation7 + $0x28] sm:$0xff]
    %v167 = vld [vmem:[#allocation7 + $0x30] sm:$0xff]
    %v168 = vld [vmem:[#allocation7 + $0x38] sm:$0xff]
    %v169 = vld [vmem:[#allocation7 + $0x40] sm:$0xff]
    %v170 = vld [vmem:[#allocation7 + $0x48] sm:$0xff]
    %v171 = vld [vmem:[#allocation7 + $0x50] sm:$0xff]
    %v172 = vld [vmem:[#allocation7 + $0x58] sm:$0xff]
    %v173 = vld [vmem:[#allocation7 + $0x60] sm:$0xff]
    %v174 = vld [vmem:[#allocation7 + $0x68] sm:$0xff]
    %v175 = vld [vmem:[#allocation7 + $0x70] sm:$0xff]
    %v176 = vld [vmem:[#allocation7 + $0x78] sm:$0xff]
    %v177 = vlaneseq
    %v178 = vshrl.u32 %v177, 7
    %v179 = vsub.s32 0, %v178
    %v180 = vrot.slane %v76, %v179
    %181 = vmatprep.subr.mxu0 0.0
    %182 = vmatpush1.msra.mxu0 %v161
    %183 = vmatprep.subr.mxu0 0.0
    %184 = vmatpush1.msra.mxu0 %v162
    %185 = vmatprep.subr.mxu0 0.0
    %186 = vmatpush1.msra.mxu0 %v163
    %187 = vmatprep.subr.mxu0 0.0
    %188 = vmatpush1.msra.mxu0 %v164
    %189 = vmatprep.subr.mxu0 0.0
    %190 = vmatpush1.msra.mxu0 %v165
    %191 = vmatprep.subr.mxu0 0.0
    %192 = vmatpush1.msra.mxu0 %v166
    %193 = vmatprep.subr.mxu0 0.0
    %194 = vmatpush1.msra.mxu0 %v167
    %195 = vmatprep.subr.mxu0 0.0
    %196 = vmatpush1.msra.mxu0 %v168
    %197 = vmatprep.subr.mxu0 0.0
    %198 = vmatpush1.msra.mxu0 %v169
    %199 = vmatprep.subr.mxu0 0.0
    %200 = vmatpush1.msra.mxu0 %v170
    %201 = vmatprep.subr.mxu0 0.0
    %202 = vmatpush1.msra.mxu0 %v171
    %203 = vmatprep.subr.mxu0 0.0
    %204 = vmatpush1.msra.mxu0 %v172
    %205 = vmatprep.subr.mxu0 0.0
    %206 = vmatpush1.msra.mxu0 %v173
    %207 = vmatprep.subr.mxu0 0.0
    %208 = vmatpush1.msra.mxu0 %v174
    %209 = vmatprep.subr.mxu0 0.0
    %210 = vmatpush1.msra.mxu0 %v175
    %211 = vmatprep.subr.mxu0 0.0
    %212 = vmatpush1.msra.mxu0 %v176
    %213 = vmatprep.subr.mxu0 0.0
    %214 = vmatpush1.msra.mxu0 0.0
    %215 = vmatprep.subr.mxu0 0.0
    %216 = vmatpush1.msra.mxu0 0.0
    %217 = vmatprep.subr.mxu0 0.0
    %218 = vmatpush1.msra.mxu0 0.0
    %219 = vmatprep.subr.mxu0 0.0
    %220 = vmatpush1.msra.mxu0 0.0
    %221 = vmatprep.subr.mxu0 0.0
    %222 = vmatpush1.msra.mxu0 0.0
    %223 = vmatprep.subr.mxu0 0.0
    %224 = vmatpush1.msra.mxu0 0.0
    %225 = vmatprep.subr.mxu0 0.0
    %226 = vmatpush1.msra.mxu0 0.0
    %227 = vmatprep.subr.mxu0 0.0
    %228 = vmatpush1.msra.mxu0 0.0
    %229 = vmatprep.subr.mxu0 0.0
    %230 = vmatpush1.msra.mxu0 0.0
    %231 = vmatprep.subr.mxu0 0.0
    %232 = vmatpush1.msra.mxu0 0.0
    %233 = vmatprep.subr.mxu0 0.0
    %234 = vmatpush1.msra.mxu0 0.0
    %235 = vmatprep.subr.mxu0 0.0
    %236 = vmatpush1.msra.mxu0 0.0
    %237 = vmatprep.subr.mxu0 0.0
    %238 = vmatpush1.msra.mxu0 0.0
    %239 = vmatprep.subr.mxu0 0.0
    %240 = vmatpush1.msra.mxu0 0.0
    %241 = vmatprep.subr.mxu0 0.0
    %242 = vmatpush1.msra.mxu0 0.0
    %243 = vmatprep.subr.mxu0 0.0
    %244 = vmatpush1.msra.mxu0 0.0
    %245 = vmatprep.mubr.f32.mxu0 0.0
    %246 = vmatmul.mubr.f32.gmra.mrb[0].mxu0 %v160
    %v247 = vpop.f32.mrb[0].mxu0
    %v248 = vadd.f32 %v180, %v247
    %v249 = vpop.f32.mrb[0].mxu0
    %250 = vdwg.mxu0
    %v251 = vmax.f32 %v248, 0.0
    %v252 = vld [vmem:[#allocation8] sm:$0xff]
    %v253 = vld [vmem:[#allocation8 + $0x8] sm:$0xff]
    %v254 = vld [vmem:[#allocation8 + $0x10] sm:$0xff]
    %v255 = vld [vmem:[#allocation8 + $0x18] sm:$0xff]
    %v256 = vld [vmem:[#allocation8 + $0x20] sm:$0xff]
    %v257 = vld [vmem:[#allocation8 + $0x28] sm:$0xff]
    %v258 = vld [vmem:[#allocation8 + $0x30] sm:$0xff]
    %v259 = vld [vmem:[#allocation8 + $0x38] sm:$0xff]
    %v260 = vld [vmem:[#allocation8 + $0x40] sm:$0xff]
    %v261 = vld [vmem:[#allocation8 + $0x48] sm:$0xff]
    %v262 = vld [vmem:[#allocation8 + $0x50] sm:$0xff]
    %v263 = vld [vmem:[#allocation8 + $0x58] sm:$0xff]
    %v264 = vld [vmem:[#allocation8 + $0x60] sm:$0xff]
    %v265 = vld [vmem:[#allocation8 + $0x68] sm:$0xff]
    %v266 = vld [vmem:[#allocation8 + $0x70] sm:$0xff]
    %v267 = vld [vmem:[#allocation8 + $0x78] sm:$0xff]
    %v268 = vlaneseq
    %v269 = vshrl.u32 %v268, 7
    %v270 = vsub.s32 0, %v269
    %v271 = vrot.slane %v77, %v270
    %272 = vmatprep.subr.mxu0 0.0
    %273 = vmatpush1.msra.mxu0 %v252
    %274 = vmatprep.subr.mxu0 0.0
    %275 = vmatpush1.msra.mxu0 %v253
    %276 = vmatprep.subr.mxu0 0.0
    %277 = vmatpush1.msra.mxu0 %v254
    %278 = vmatprep.subr.mxu0 0.0
    %279 = vmatpush1.msra.mxu0 %v255
    %280 = vmatprep.subr.mxu0 0.0
    %281 = vmatpush1.msra.mxu0 %v256
    %282 = vmatprep.subr.mxu0 0.0
    %283 = vmatpush1.msra.mxu0 %v257
    %284 = vmatprep.subr.mxu0 0.0
    %285 = vmatpush1.msra.mxu0 %v258
    %286 = vmatprep.subr.mxu0 0.0
    %287 = vmatpush1.msra.mxu0 %v259
    %288 = vmatprep.subr.mxu0 0.0
    %289 = vmatpush1.msra.mxu0 %v260
    %290 = vmatprep.subr.mxu0 0.0
    %291 = vmatpush1.msra.mxu0 %v261
    %292 = vmatprep.subr.mxu0 0.0
    %293 = vmatpush1.msra.mxu0 %v262
    %294 = vmatprep.subr.mxu0 0.0
    %295 = vmatpush1.msra.mxu0 %v263
    %296 = vmatprep.subr.mxu0 0.0
    %297 = vmatpush1.msra.mxu0 %v264
    %298 = vmatprep.subr.mxu0 0.0
    %299 = vmatpush1.msra.mxu0 %v265
    %300 = vmatprep.subr.mxu0 0.0
    %301 = vmatpush1.msra.mxu0 %v266
    %302 = vmatprep.subr.mxu0 0.0
    %303 = vmatpush1.msra.mxu0 %v267
    %304 = vmatprep.subr.mxu0 0.0
    %305 = vmatpush1.msra.mxu0 0.0
    %306 = vmatprep.subr.mxu0 0.0
    %307 = vmatpush1.msra.mxu0 0.0
    %308 = vmatprep.subr.mxu0 0.0
    %309 = vmatpush1.msra.mxu0 0.0
    %310 = vmatprep.subr.mxu0 0.0
    %311 = vmatpush1.msra.mxu0 0.0
    %312 = vmatprep.subr.mxu0 0.0
    %313 = vmatpush1.msra.mxu0 0.0
    %314 = vmatprep.subr.mxu0 0.0
    %315 = vmatpush1.msra.mxu0 0.0
    %316 = vmatprep.subr.mxu0 0.0
    %317 = vmatpush1.msra.mxu0 0.0
    %318 = vmatprep.subr.mxu0 0.0
    %319 = vmatpush1.msra.mxu0 0.0
    %320 = vmatprep.subr.mxu0 0.0
    %321 = vmatpush1.msra.mxu0 0.0
    %322 = vmatprep.subr.mxu0 0.0
    %323 = vmatpush1.msra.mxu0 0.0
    %324 = vmatprep.subr.mxu0 0.0
    %325 = vmatpush1.msra.mxu0 0.0
    %326 = vmatprep.subr.mxu0 0.0
    %327 = vmatpush1.msra.mxu0 0.0
    %328 = vmatprep.subr.mxu0 0.0
    %329 = vmatpush1.msra.mxu0 0.0
    %330 = vmatprep.subr.mxu0 0.0
    %331 = vmatpush1.msra.mxu0 0.0
    %332 = vmatprep.subr.mxu0 0.0
    %333 = vmatpush1.msra.mxu0 0.0
    %334 = vmatprep.subr.mxu0 0.0
    %335 = vmatpush1.msra.mxu0 0.0
    %336 = vmatprep.mubr.f32.mxu0 0.0
    %337 = vmatmul.mubr.f32.gmra.mrb[0].mxu0 %v251
    %v338 = vpop.f32.mrb[0].mxu0
    %v339 = vadd.f32 %v271, %v338
    %v340 = vpop.f32.mrb[0].mxu0
    %341 = vdwg.mxu0
    %v342 = vtanh.pop %v339
    %343 = vst [vmem:[#allocation10] sm:$0xff] %v342
    // Predicated region
    $region38: #{tpu_custom_call.1} parent=1 // pred_check
      _
    $region39: #{tpu_custom_call.1} parent=1 // pred_check_branch
      %345 = sbr.rel (0) target = $region41
    $region40: #{tpu_custom_call.1} parent=1 // pred_region
      %s347 = ssub.s32 128, 128
      %348 = vsyncadd [#allocation4], %s347
      %s350 = sshll.u32 [#allocation10], 4
      %s351 = int_to_ptr.vmem [resolvable:$true] %s350
      %353 = dma.vmem_to_hbm [thread:$0]  %s351, 128, %s5, [#allocation4]
    $region41: #{tpu_custom_call.1} parent=1 // pred_fallthru
      _
    // Predicated region
    $region42: #{tpu_custom_call.1} parent=1 // pred_check
      _
    $region43: #{tpu_custom_call.1} parent=1 // pred_check_branch
      %355 = sbr.rel (0) target = $region45
    $region44: #{tpu_custom_call.1} parent=1 // pred_region
      %356 = dma.done [#allocation4], 128
    $region45: #{tpu_custom_call.1} parent=1 // pred_fallthru
      _
    %357 = vsyncpa [#allocation3], 1
    %358 = vsyncpa [#allocation6], 1
    %359 = vsyncpa [#allocation9], 1
    %360 = vsyncpa [#allocation4], 1

</llo_original>
